<compile_context>
chip_gen: v5e
topology: v5e:2x2
jax: 0.10.0
libtpu: 0.0.40
codegen_flags: <defaults>
</compile_context>

<pallas_src>
import functools

import jax
import jax.numpy as jnp
from jax.experimental import pallas as pl
from jax.experimental.pallas import tpu as pltpu

_NEG = -1e30             # f32-safe mask value; post-matmul math stays f32 (do NOT move to bf16)
_ACT_W = 128             # lane-dense int32 slab width for act() output
_VMEM_BUDGET = 24 << 20  # target double-buffered working set (headroom on v7x's 64 MiB physical)
_VMEM_CAP = 48 << 20     # explicit scoped-VMEM ceiling (safe on v5e/v6e/v7x)


def _round_up(n, m):
    return ((n + m - 1) // m) * m


def _pad_rows(arr, rows):
    pad = rows - arr.shape[0]
    if pad == 0:
        return arr
    return jnp.pad(arr, ((0, pad),) + ((0, 0),) * (arr.ndim - 1))


def _tiling(batch, feat, a_pad, x_itemsize, w_itemsize, out_lanes, max_tb=512):
    """Pick the batch-tile size from the VMEM budget.

    Budget = double-buffered x tile + single-buffered fused weights/bias +
    double-buffered output slab + double-buffered action column.  When the
    batch allows, force >= 2 grid steps so both v7x TensorCores get work."""
    b8 = _round_up(batch, 8)
    fixed = feat * a_pad * w_itemsize + a_pad * 4                    # W + bias (single-buffered)
    per_row = 2 * feat * x_itemsize + 2 * out_lanes * 4 + 2 * 4      # x, out, action (double-buffered)
    avail = max(_VMEM_BUDGET - fixed, 8 * per_row)
    tb = int(min(max_tb, b8, max(8, (avail // per_row) // 8 * 8)))
    if b8 >= 16:                                                     # >= 2 grid steps (v7x megacore)
        tb = min(tb, _round_up((b8 + 1) // 2, 8))
    b_pad = _round_up(batch, tb)
    # Explicit scoped-VMEM limit; only ever *raised* above the smallest (v5e) default.
    vmem_limit = int(min(_VMEM_CAP, max(fixed + per_row * tb + (2 << 20), 16 << 20)))
    return tb, b_pad, vmem_limit


# ----------------------------------------------------------------------------
# Kernels
# ----------------------------------------------------------------------------
def _evaluate_actions_kernel(x_ref, w_ref, b_ref, a_ref, out_ref, *, num_actions):
    """One fused MXU pass (actor logits + critic value) followed by masked
    softmax / log_softmax, action log-prob gather (in-kernel iota mask) and
    per-row entropy.  Everything lands in ONE lane-dense slab:
      lanes [0, A) : logits
      lane  A      : value        (straight out of the fused matmul)
      lane  A + 1  : action log-prob
      lane  A + 2  : per-row entropy
    """
    A = num_actions
    fused = jnp.dot(x_ref[...], w_ref[...],
                    preferred_element_type=jnp.float32) + b_ref[...]   # [TB, a_pad] f32

    lane = jax.lax.broadcasted_iota(jnp.int32, fused.shape, 1)
    valid = lane < A

    # masked, numerically stable softmax / log_softmax over the A real lanes
    ml = jnp.where(valid, fused, jnp.float32(_NEG))
    m = jnp.max(ml, axis=1, keepdims=True)
    z = ml - m
    e = jnp.where(valid, jnp.exp(z), 0.0)
    s = jnp.sum(e, axis=1, keepdims=True)
    log_probs = z - jnp.log(s)
    probs = e / s                     # exact divide: mem-bound kernel, VPU slot is free

    amask = (lane == a_ref[...]).astype(jnp.float32)                   # [TB, a_pad]
    alogp = jnp.sum(log_probs * amask, axis=1, keepdims=True)          # [TB, 1]
    ent_row = -jnp.sum(probs * log_probs, axis=1, keepdims=True)       # [TB, 1]

    # padded weight/bias columns are zero, so lanes >= A of `fused` are exactly 0
    out_ref[...] = (fused
                    + jnp.where(lane == A + 1, alogp, 0.0)
                    + jnp.where(lane == A + 2, ent_row, 0.0))


def _act_kernel(x_ref, w_ref, b_ref, act_ref, *, num_actions):
    """Fused forward + deterministic action = first argmax over logits
    (softmax is monotonic, so no exp/sum/divide needed)."""
    A = num_actions
    logit = jnp.dot(x_ref[...], w_ref[...],
                    preferred_element_type=jnp.float32) + b_ref[...]
    lane = jax.lax.broadcasted_iota(jnp.int32, logit.shape, 1)
    ml = jnp.where(lane < A, logit, jnp.float32(_NEG))
    rowmax = jnp.max(ml, axis=1, keepdims=True)
    ids = jnp.where(ml == rowmax, lane, logit.shape[1])                # first max -> min index
    idx = jnp.min(ids, axis=1, keepdims=True)                          # [TB, 1] int32
    act_ref[...] = jnp.broadcast_to(idx, act_ref.shape)                # lane-dense int32 slab


# ----------------------------------------------------------------------------
# Wrappers
# ----------------------------------------------------------------------------
def fuse_heads(wpi, bpi, wv, bv, matmul_dtype=jnp.float32):
    """Fuse the critic head as one extra column of the actor head and pad the
    column count to a multiple of 128 lanes with >= 3 spare lanes for the
    packed stats (value | alogp | entropy).

    Call ONCE when parameters are created/updated (not per step): rebuilding the
    (F, a_pad) slab in HBM every call would rival the kernel itself.
    bf16 weights are fine on v5e/v6e/v7x (bf16 MXU inputs, f32 accumulation);
    the bias stays f32 because it is added to the f32 accumulator."""
    F, A = wpi.shape
    a_pad = _round_up(A + 4, 128)      # >= 3 spare lanes even when A+1 hits a 128 boundary
    w = (jnp.zeros((F, a_pad), jnp.float32)
         .at[:, :A].set(wpi)
         .at[:, A:A + 1].set(jnp.reshape(wv, (F, 1))))
    b = (jnp.zeros((1, a_pad), jnp.float32)
         .at[:, :A].set(jnp.reshape(bpi, (1, A)))
         .at[:, A:A + 1].set(jnp.reshape(bv, (1, 1))))
    return w.astype(matmul_dtype), b


@functools.partial(jax.jit, static_argnames=("num_actions", "max_tb"))
def evaluate_actions(x, w_fused, b_fused, action, *, num_actions, max_tb=512):
    """Returns (logit, action_log_probs, value, entropy) like OnPolicy.evaluate_actions.
    `x` is used in its incoming dtype (pass bf16 from the producer to halve HBM reads)."""
    B, F = x.shape
    A = num_actions
    a_pad = w_fused.shape[1]
    tb, b_pad, vmem_limit = _tiling(B, F, a_pad, x.dtype.itemsize,
                                    w_fused.dtype.itemsize, a_pad, max_tb=max_tb)
    x_p = _pad_rows(x, b_pad)                                   # no dtype cast in the wrapper
    a_p = _pad_rows(action.astype(jnp.int32).reshape(B, 1), b_pad)

    kernel = functools.partial(_evaluate_actions_kernel, num_actions=A)
    slab = pl.pallas_call(
        kernel,
        out_shape=jax.ShapeDtypeStruct((b_pad, a_pad), jnp.float32),
        grid=(b_pad // tb,),
        in_specs=[pl.BlockSpec((tb, F), lambda i: (i, 0)),       # x tile
                  pl.BlockSpec((F, a_pad), lambda i: (0, 0),     # fused weights, pinned
                               pipeline_mode=pl.Buffered(1)),
                  pl.BlockSpec((1, a_pad), lambda i: (0, 0),     # fused bias, pinned
                               pipeline_mode=pl.Buffered(1)),
                  pl.BlockSpec((tb, 1), lambda i: (i, 0))],      # int32 actions
        out_specs=pl.BlockSpec((tb, a_pad), lambda i: (i, 0)),
        compiler_params=pltpu.CompilerParams(
            dimension_semantics=("parallel",),
            vmem_limit_bytes=vmem_limit),
    )(x_p, w_fused, b_fused, a_p)

    logit = slab[:B, :A]
    value = slab[:B, A:A + 1]
    action_log_probs = slab[:B, A + 1:A + 2]
    entropy = jnp.mean(slab[:B, A + 2])
    return logit, action_log_probs, value, entropy


@functools.partial(jax.jit, static_argnames=("num_actions", "deterministic", "max_tb"))
def act(x, w_fused, b_fused, *, num_actions, deterministic=True, max_tb=512):
    """Deterministic action = argmax over logits (== argmax over softmax probs)."""
    if not deterministic:
        # TODO(synk): deterministic=False (probs.multinomial) needs on-chip sampling
        #             (pltpu.prng_seed + prng_random_bits + Gumbel-max); not kernelized.
        raise NotImplementedError("stochastic sampling path is not kernelized")
    B, F = x.shape
    a_pad = w_fused.shape[1]
    tb, b_pad, vmem_limit = _tiling(B, F, a_pad, x.dtype.itemsize,
                                    w_fused.dtype.itemsize, _ACT_W, max_tb=max_tb)
    x_p = _pad_rows(x, b_pad)

    kernel = functools.partial(_act_kernel, num_actions=num_actions)
    act_pad = pl.pallas_call(
        kernel,
        out_shape=jax.ShapeDtypeStruct((b_pad, _ACT_W), jnp.int32),
        grid=(b_pad // tb,),
        in_specs=[pl.BlockSpec((tb, F), lambda i: (i, 0)),
                  pl.BlockSpec((F, a_pad), lambda i: (0, 0),
                               pipeline_mode=pl.Buffered(1)),
                  pl.BlockSpec((1, a_pad), lambda i: (0, 0),
                               pipeline_mode=pl.Buffered(1))],
        out_specs=pl.BlockSpec((tb, _ACT_W), lambda i: (i, 0)),
        compiler_params=pltpu.CompilerParams(
            dimension_semantics=("parallel",),
            vmem_limit_bytes=vmem_limit),
    )(x_p, w_fused, b_fused)
    return act_pad[:B, 0:1]


# ----------------------------------------------------------------------------
# Reference + main
# ----------------------------------------------------------------------------
def _reference(x, wpi, bpi, wv, bv, action):
    logit = x @ wpi + bpi
    value = x @ wv + bv
    logp = jax.nn.log_softmax(logit, axis=1)
    p = jax.nn.softmax(logit, axis=1)
    alogp = jnp.take_along_axis(logp, action, axis=1)
    ent = -(p * logp).sum(1).mean()
    a_det = jnp.argmax(logit, axis=1, keepdims=True).astype(jnp.int32)
    return logit, alogp, value, ent, a_det


def _make_inputs(key, B, F, A):
    ks = jax.random.split(key, 6)
    x = jax.random.normal(ks[0], (B, F), dtype=jnp.float32)
    wpi = jax.random.normal(ks[1], (F, A), dtype=jnp.float32) * 0.1
    bpi = jax.random.normal(ks[2], (1, A), dtype=jnp.float32) * 0.1
    wv = jax.random.normal(ks[3], (F, 1), dtype=jnp.float32) * 0.1
    bv = jax.random.normal(ks[4], (1, 1), dtype=jnp.float32) * 0.1
    action = jax.random.randint(ks[5], (B, 1), 0, A, dtype=jnp.int32)
    return x, wpi, bpi, wv, bv, action


if __name__ == "__main__":
    key = jax.random.PRNGKey(0)
    k1, k2 = jax.random.split(key)

    # --- test 1: single-tile batch, f32 ------------------------------------
    B, F, A = 8, 32, 8
    x, wpi, bpi, wv, bv, action = _make_inputs(k1, B, F, A)
    w_f, b_f = fuse_heads(wpi, bpi, wv, bv)                # hoisted: fuse once, reuse

    logit, alogp, value, ent = evaluate_actions(x, w_f, b_f, action, num_actions=A)
    a_det = act(x, w_f, b_f, num_actions=A, deterministic=True)
    jax.block_until_ready((logit, alogp, value, ent, a_det))

    r_logit, r_alogp, r_value, r_ent, r_act = _reference(x, wpi, bpi, wv, bv, action)
    assert jnp.allclose(logit, r_logit, atol=1e-5)
    assert jnp.allclose(value, r_value, atol=1e-5)
    assert jnp.allclose(alogp, r_alogp, atol=1e-5)
    assert jnp.allclose(ent, r_ent, atol=1e-4)             # exact reciprocal now
    assert jnp.array_equal(a_det, r_act)

    # --- test 2: multi-tile grid (row padding + non-pow2 A), f32 ------------
    B2, F2, A2 = 20, 32, 5
    x2, wpi2, bpi2, wv2, bv2, action2 = _make_inputs(k2, B2, F2, A2)
    w_f2, b_f2 = fuse_heads(wpi2, bpi2, wv2, bv2)
    logit2, alogp2, value2, ent2 = evaluate_actions(
        x2, w_f2, b_f2, action2, num_actions=A2, max_tb=8)
    a_det2 = act(x2, w_f2, b_f2, num_actions=A2, deterministic=True, max_tb=8)
    jax.block_until_ready((logit2, alogp2, value2, ent2, a_det2))

    r_logit2, r_alogp2, r_value2, r_ent2, r_act2 = _reference(
        x2, wpi2, bpi2, wv2, bv2, action2)
    assert jnp.allclose(logit2, r_logit2, atol=1e-5)
    assert jnp.allclose(value2, r_value2, atol=1e-5)
    assert jnp.allclose(alogp2, r_alogp2, atol=1e-5)
    assert jnp.allclose(ent2, r_ent2, atol=1e-4)
    assert jnp.array_equal(a_det2, r_act2)

    # --- test 3: bf16 producer inputs (x AND weights), valid on all chips ----
    w_bf, b_bf = fuse_heads(wpi, bpi, wv, bv, matmul_dtype=jnp.bfloat16)
    x_bf = x.astype(jnp.bfloat16)                # cast at the producer, not in the wrapper
    logit_bf, alogp_bf, value_bf, ent_bf = evaluate_actions(
        x_bf, w_bf, b_bf, action, num_actions=A)
    a_bf = act(x_bf, w_bf, b_bf, num_actions=A, deterministic=True)
    jax.block_until_ready((logit_bf, alogp_bf, value_bf, ent_bf, a_bf))
    assert jnp.allclose(logit_bf, r_logit, atol=1e-1)
    assert jnp.allclose(value_bf, r_value, atol=5e-2)
    assert jnp.allclose(alogp_bf, r_alogp, atol=2e-1)
    assert jnp.allclose(ent_bf, r_ent, atol=1e-1)
    # bf16 can legitimately flip near-ties vs the f32 argmax; check the chosen
    # action's f32 logit is (near-)maximal instead of exact index equality.
    chosen = jnp.take_along_axis(r_logit, a_bf, axis=1)
    assert jnp.all(chosen >= jnp.max(r_logit, axis=1, keepdims=True) - 1e-1)

    print("KERNEL_OK")
</pallas_src>

<mosaic_0001>
module attributes {stable_mosaic.version = 11 : i64} {
  func.func @_evaluate_actions_kernel(%arg0: i32, %arg1: memref<8x32xf32, #tpu.memory_space<vmem>>, %arg2: memref<32x128xf32, #tpu.memory_space<vmem>>, %arg3: memref<1x128xf32, #tpu.memory_space<vmem>>, %arg4: memref<8x1xi32, #tpu.memory_space<vmem>>, %arg5: memref<8x128xf32, #tpu.memory_space<vmem>>) attributes {dimension_semantics = [#tpu.dimension_semantics<parallel>], iteration_bounds = array<i64: 1>, scalar_prefetch = 0 : i64, scratch_operands = 0 : i64, tpu.core_type = #tpu.core_type<tc>, window_params = [{transform_indices = @transform_0, window_bounds = array<i64: 8, 32>}, {pipeline_mode = #tpu.pipeline_mode<synchronous>, transform_indices = @transform_1, window_bounds = array<i64: 32, 128>}, {pipeline_mode = #tpu.pipeline_mode<synchronous>, transform_indices = @transform_2, window_bounds = array<i64: 1, 128>}, {transform_indices = @transform_3, window_bounds = array<i64: 8, 1>}, {transform_indices = @transform_4, window_bounds = array<i64: 8, 128>}]} {
    %c0 = arith.constant 0 : index
    %c0_0 = arith.constant 0 : index
    %0 = vector.load %arg1[%c0, %c0_0] : memref<8x32xf32, #tpu.memory_space<vmem>>, vector<8x32xf32>
    %c0_1 = arith.constant 0 : index
    %c0_2 = arith.constant 0 : index
    %1 = vector.load %arg2[%c0_1, %c0_2] : memref<32x128xf32, #tpu.memory_space<vmem>>, vector<32x128xf32>
    %cst = arith.constant dense<0.000000e+00> : vector<8x128xf32>
    %2 = tpu.matmul %0, %1, %cst {dimension_numbers = #tpu.dot_dimension_numbers<[1], [0], [0], [1], [0, 0, 1, 1], [], []>} : vector<8x32xf32>, vector<32x128xf32>, vector<8x128xf32> -> vector<8x128xf32>
    %c0_3 = arith.constant 0 : index
    %c0_4 = arith.constant 0 : index
    %3 = vector.load %arg3[%c0_3, %c0_4] : memref<1x128xf32, #tpu.memory_space<vmem>>, vector<1x128xf32>
    %4 = vector.broadcast %3 : vector<1x128xf32> to vector<8x128xf32>
    %5 = arith.addf %2, %4 : vector<8x128xf32>
    %6 = tpu.iota {dimensions = array<i32: 1>} : vector<8x128xi32>
    %c8_i32 = arith.constant 8 : i32
    %7 = vector.broadcast %c8_i32 : i32 to vector<8x128xi32>
    %8 = arith.cmpi slt, %6, %7 : vector<8x128xi32>
    %cst_5 = arith.constant -1.000000e+30 : f32
    %9 = vector.broadcast %cst_5 : f32 to vector<8x128xf32>
    %10 = arith.select %8, %5, %9 : vector<8x128xi1>, vector<8x128xf32>
    %cst_6 = arith.constant dense<0xFF800000> : vector<8xf32>
    %11 = vector.multi_reduction <maximumf>, %10, %cst_6 [1] : vector<8x128xf32> to vector<8xf32>
    %12 = vector.shape_cast %11 : vector<8xf32> to vector<8x1xf32>
    %13 = vector.broadcast %12 : vector<8x1xf32> to vector<8x128xf32>
    %14 = arith.subf %10, %13 : vector<8x128xf32>
    %15 = math.exp %14 : vector<8x128xf32>
    %cst_7 = arith.constant 0.000000e+00 : f32
    %16 = vector.broadcast %cst_7 : f32 to vector<8x128xf32>
    %17 = arith.select %8, %15, %16 : vector<8x128xi1>, vector<8x128xf32>
    %cst_8 = arith.constant dense<0.000000e+00> : vector<8xf32>
    %18 = vector.multi_reduction <add>, %17, %cst_8 [1] : vector<8x128xf32> to vector<8xf32>
    %19 = vector.shape_cast %18 : vector<8xf32> to vector<8x1xf32>
    %20 = math.log %19 : vector<8x1xf32>
    %21 = vector.broadcast %20 : vector<8x1xf32> to vector<8x128xf32>
    %22 = arith.subf %14, %21 : vector<8x128xf32>
    %23 = vector.broadcast %19 : vector<8x1xf32> to vector<8x128xf32>
    %24 = arith.divf %17, %23 : vector<8x128xf32>
    %c0_9 = arith.constant 0 : index
    %c0_10 = arith.constant 0 : index
    %25 = vector.load %arg4[%c0_9, %c0_10] : memref<8x1xi32, #tpu.memory_space<vmem>>, vector<8x1xi32>
    %26 = vector.broadcast %25 : vector<8x1xi32> to vector<8x128xi32>
    %27 = arith.cmpi eq, %6, %26 : vector<8x128xi32>
    %28 = arith.extui %27 : vector<8x128xi1> to vector<8x128xi32>
    %29 = arith.sitofp %28 : vector<8x128xi32> to vector<8x128xf32>
    %30 = arith.mulf %22, %29 : vector<8x128xf32>
    %cst_11 = arith.constant dense<0.000000e+00> : vector<8xf32>
    %31 = vector.multi_reduction <add>, %30, %cst_11 [1] : vector<8x128xf32> to vector<8xf32>
    %32 = vector.shape_cast %31 : vector<8xf32> to vector<8x1xf32>
    %33 = arith.mulf %24, %22 : vector<8x128xf32>
    %cst_12 = arith.constant dense<0.000000e+00> : vector<8xf32>
    %34 = vector.multi_reduction <add>, %33, %cst_12 [1] : vector<8x128xf32> to vector<8xf32>
    %35 = vector.shape_cast %34 : vector<8xf32> to vector<8x1xf32>
    %cst_13 = arith.constant 0.000000e+00 : f32
    %36 = vector.broadcast %cst_13 : f32 to vector<8x1xf32>
    %37 = arith.subf %36, %35 : vector<8x1xf32>
    %c9_i32 = arith.constant 9 : i32
    %38 = vector.broadcast %c9_i32 : i32 to vector<8x128xi32>
    %39 = arith.cmpi eq, %6, %38 : vector<8x128xi32>
    %cst_14 = arith.constant 0.000000e+00 : f32
    %40 = vector.shape_cast %32 : vector<8x1xf32> to vector<8x1xf32>
    %41 = vector.broadcast %40 : vector<8x1xf32> to vector<8x128xf32>
    %42 = vector.broadcast %cst_14 : f32 to vector<8x128xf32>
    %43 = arith.select %39, %41, %42 : vector<8x128xi1>, vector<8x128xf32>
    %44 = arith.addf %5, %43 : vector<8x128xf32>
    %c10_i32 = arith.constant 10 : i32
    %45 = vector.broadcast %c10_i32 : i32 to vector<8x128xi32>
    %46 = arith.cmpi eq, %6, %45 : vector<8x128xi32>
    %cst_15 = arith.constant 0.000000e+00 : f32
    %47 = vector.shape_cast %37 : vector<8x1xf32> to vector<8x1xf32>
    %48 = vector.broadcast %47 : vector<8x1xf32> to vector<8x128xf32>
    %49 = vector.broadcast %cst_15 : f32 to vector<8x128xf32>
    %50 = arith.select %46, %48, %49 : vector<8x128xi1>, vector<8x128xf32>
    %51 = arith.addf %44, %50 : vector<8x128xf32>
    %c0_16 = arith.constant 0 : index
    %c0_17 = arith.constant 0 : index
    %52 = vector.load %arg5[%c0_16, %c0_17] : memref<8x128xf32, #tpu.memory_space<vmem>>, vector<8x128xf32>
    tpu.vector_store %arg5[%c0_16, %c0_17], %51 {strides = array<i32>} : memref<8x128xf32, #tpu.memory_space<vmem>>, vector<8x128xf32>,
    return
  }
  func.func @transform_0(%arg0: i32) -> (i32, i32) {
    %c0_i32 = arith.constant 0 : i32
    %c0_i32_0 = arith.constant 0 : i32
    return %arg0, %c0_i32 : i32, i32
  }
  func.func @transform_1(%arg0: i32) -> (i32, i32) {
    %c0_i32 = arith.constant 0 : i32
    %c0_i32_0 = arith.constant 0 : i32
    %c0_i32_1 = arith.constant 0 : i32
    return %c0_i32, %c0_i32_0 : i32, i32
  }
  func.func @transform_2(%arg0: i32) -> (i32, i32) {
    %c0_i32 = arith.constant 0 : i32
    %c0_i32_0 = arith.constant 0 : i32
    %c0_i32_1 = arith.constant 0 : i32
    return %c0_i32, %c0_i32_0 : i32, i32
  }
  func.func @transform_3(%arg0: i32) -> (i32, i32) {
    %c0_i32 = arith.constant 0 : i32
    %c0_i32_0 = arith.constant 0 : i32
    return %arg0, %c0_i32 : i32, i32
  }
  func.func @transform_4(%arg0: i32) -> (i32, i32) {
    %c0_i32 = arith.constant 0 : i32
    %c0_i32_0 = arith.constant 0 : i32
    return %arg0, %c0_i32 : i32, i32
  }
}

</mosaic_0001>

<llo_original>
// kernel: evaluate_actions.1
$region0: #{evaluate_actions.1}
  #allocation0 [shape = 'u32[]', space=smem, size = 0x4, offset = 0x4, fixed_abs, tag = 'smem constant byte address 0x4 - core index']
  #allocation1 [shape = 'u32[72,128]{1,0:T(1,128)}', space=vmem, size = 0x9000, scoped, tag = 'internal scratch']
  %s0 = inlined_call_operand.vmem [shape: f32[8,32], index: 0, kind: input, shape index: {}]
  %s1 = inlined_call_operand.hbm [shape: f32[32,128], index: 1, kind: input, shape index: {}]
  %s2 = inlined_call_operand.vmem [shape: f32[1,128], index: 2, kind: input, shape index: {}]
  %s3 = inlined_call_operand.vmem [shape: s32[8,1], index: 3, kind: input, shape index: {}]
  %s4 = inlined_call_operand.vmem [shape: f32[8,128], index: 4, kind: output, shape index: {}]
  %s5 = sld [smem:[#allocation0]]
  $region30: #{evaluate_actions.1} parent=0
    _
  %s7 = ssub.s32 1, %s5
  %s8 = scalar_select 0, %s7, %s5
  $region1: #{evaluate_actions.1} parent=0
    #allocation2 [shape = 'u8[16384]{0}', space=vmem, size = 0x4000, scoped, tag = 'input window, operand 1, single buffered']
    #allocation3 [shape = 's32[1]{0}', space=sflag, size = 0x4, scoped, tag = 'scoped memory for evaluate_actions.1']
    %9 = vsyncpa [#allocation3], 0
    // Predicated region
    $region2: #{evaluate_actions.1} parent=1 // pred_check
      _
    $region3: #{evaluate_actions.1} parent=1 // pred_check_branch
      %11 = sbr.rel (0) target = $region5
    $region4: #{evaluate_actions.1} parent=1 // pred_region
      _
    $region5: #{evaluate_actions.1} parent=1 // pred_fallthru
      _
    // Predicated region
    $region6: #{evaluate_actions.1} parent=1 // pred_check
      _
    $region7: #{evaluate_actions.1} parent=1 // pred_check_branch
      %13 = sbr.rel (0) target = $region9
    $region8: #{evaluate_actions.1} parent=1 // pred_region
      %15 = vsyncadd [#allocation3], 0
      %s16 = sshll.u32 %s1, 4
      %s17 = int_to_ptr.hbm [resolvable:$true] %s16
      %s18 = sshll.u32 [#allocation2], 4
      %s19 = int_to_ptr.vmem [resolvable:$true] %s18
      %24 = dma.hbm_to_vmem [thread:$0]  %s17, 512, %s19, [#allocation3], 128, 128, 8
    $region9: #{evaluate_actions.1} parent=1 // pred_fallthru
      _
    // Predicated region
    $region10: #{evaluate_actions.1} parent=1 // pred_check
      _
    $region11: #{evaluate_actions.1} parent=1 // pred_check_branch
      %26 = sbr.rel (0) target = $region13
    $region12: #{evaluate_actions.1} parent=1 // pred_region
      _
    $region13: #{evaluate_actions.1} parent=1 // pred_fallthru
      _
    // Predicated region
    $region14: #{evaluate_actions.1} parent=1 // pred_check
      _
    $region15: #{evaluate_actions.1} parent=1 // pred_check_branch
      %28 = sbr.rel (0) target = $region17
    $region16: #{evaluate_actions.1} parent=1 // pred_region
      _
    $region17: #{evaluate_actions.1} parent=1 // pred_fallthru
      _
    // Predicated region
    $region18: #{evaluate_actions.1} parent=1 // pred_check
      _
    $region19: #{evaluate_actions.1} parent=1 // pred_check_branch
      %30 = sbr.rel (0) target = $region21
    $region20: #{evaluate_actions.1} parent=1 // pred_region
      %32 = dma.done [#allocation3], 512
    $region21: #{evaluate_actions.1} parent=1 // pred_fallthru
      _
    %v33 = vld [vmem:[%s0] sm:$0xff]
    %v34 = vld [vmem:[#allocation2] sm:$0xff]
    %v35 = vld [vmem:[#allocation2 + $0x8] sm:$0xff]
    %v36 = vld [vmem:[#allocation2 + $0x10] sm:$0xff]
    %v37 = vld [vmem:[#allocation2 + $0x18] sm:$0xff]
    %v38 = vld [vmem:[%s2] sm:$0x1]
    %v40 = vperm.slane %v38, 0
    %vm42 = vcmask 261120
    %v44 = vsel %vm42, %v33, 0
    %46 = vmatpush.msra.mxu0 0.0
    %47 = vmatpush.msra.mxu0 0.0
    %48 = vmatpush.msra.mxu0 0.0
    %49 = vmatpush.msra.mxu0 0.0
    %50 = vmatpush.msra.mxu0 0.0
    %51 = vmatpush.msra.mxu0 0.0
    %52 = vmatpush.msra.mxu0 0.0
    %53 = vmatpush.msra.mxu0 0.0
    %54 = vmatpush.msra.mxu0 0.0
    %55 = vmatpush.msra.mxu0 0.0
    %56 = vmatpush.msra.mxu0 0.0
    %57 = vmatpush.msra.mxu0 0.0
    %58 = vmatpush.msra.mxu0 %v37
    %59 = vmatpush.msra.mxu0 %v36
    %60 = vmatpush.msra.mxu0 %v35
    %61 = vmatpush.msra.mxu0 %v34
    %62 = vmatmul.f32.gmra.mxu0 %v44
    %v63 = vpop.f32.mrf.mxu0
    %v64 = vadd.f32 %v40, %v63
    %65 = vdwg.mxu0
    %v66 = vlaneseq
    %v67 = vand.u32 %v66, 127
    %vm68 = vcmp.lt.s32.totalorder %v67, 8
    %v69 = vsel %vm68, %v64, -1e+30
    %70 = vmax.xlane.f32.xlu0 %v69
    %v71 = vpop.xlane.xlu0 %70
    %v72 = vsub.f32 %v69, %v71
    %v73 = vmul.f32 %v72, 1.442695
    %v74 = vpow.pop %v73
    %v75 = vsel %vm68, %v74, 0.0
    %76 = vadd.xlane.f32.xlu0 %v75
    %v77 = vpop.xlane.xlu0 %76
    %v78 = vlog2.pop %v77
    %v79 = vmul.f32 %v78, 0.6931472
    %v80 = vsub.f32 %v72, %v79
    %v81 = vrcp.pop %v77
    %v82 = vmul.f32 %v77, %v81
    %v83 = vsub.f32 1.0, %v82
    %v84 = vmul.f32 %v81, %v83
    %v85 = vadd.f32 %v81, %v84
    %vm86 = vweird.f32 %v77
    %vm87 = vweird.f32 %v81
    %vm88 = vmor %vm86, %vm87
    %v89 = vsel %vm88, %v81, %v85
    %v90 = vand.u32 2147483647, %v77
    %vm91 = vcmp.eq.f32.partialorder %v90, 8.507059e+37
    %v92 = vand.u32 %v77, 2147483648
    %v93 = vor.u32 1.1754944e-38, %v92
    %v94 = vsel %vm91, %v93, %v89
    %v95 = vmul.f32 %v75, %v94
    %v96 = vld [vmem:[%s3] sm:$0xff]
    %97 = vset.pattern.permute.xlu0 0
    %98 = vperm.xlu0 %97, %v96
    %v99 = vpop.permute.xlu0 %98
    %vm100 = vcmp.eq.s32.totalorder %v67, %v99
    %v101 = vsel %vm100, 1, 0
    %v102 = vcvt.s32.f32 %v101
    %v103 = vmul.f32 %v80, %v102
    %104 = vadd.xlane.f32.xlu0 %v103
    %v105 = vpop.xlane.xlu0 %104
    %v106 = vmul.f32 %v95, %v80
    %107 = vadd.xlane.f32.xlu0 %v106
    %v108 = vpop.xlane.xlu0 %107
    %v109 = vsub.f32 0.0, %v108
    %vm110 = vcmp.eq.s32.totalorder %v67, 9
    %v111 = vsel %vm110, %v105, 0.0
    %v112 = vadd.f32 %v64, %v111
    %vm113 = vcmp.eq.s32.totalorder %v67, 10
    %v114 = vsel %vm113, %v109, 0.0
    %v115 = vadd.f32 %v112, %v114
    %116 = vst [vmem:[%s4] sm:$0xff] %v115
    // Predicated region
    $region22: #{evaluate_actions.1} parent=1 // pred_check
      _
    $region23: #{evaluate_actions.1} parent=1 // pred_check_branch
      %118 = sbr.rel (0) target = $region25
    $region24: #{evaluate_actions.1} parent=1 // pred_region
      _
    $region25: #{evaluate_actions.1} parent=1 // pred_fallthru
      _
    // Predicated region
    $region26: #{evaluate_actions.1} parent=1 // pred_check
      _
    $region27: #{evaluate_actions.1} parent=1 // pred_check_branch
      %120 = sbr.rel (0) target = $region29
    $region28: #{evaluate_actions.1} parent=1 // pred_region
      _
    $region29: #{evaluate_actions.1} parent=1 // pred_fallthru
      _
    %121 = vsyncpa [#allocation3], 1

</llo_original>
